<compile_context>
chip_gen: v5e
topology: v5e:2x2
jax: 0.10.0
libtpu: 0.0.40
codegen_flags: <defaults>
</compile_context>

<pallas_src>
import functools

import jax
import jax.numpy as jnp
from jax import lax
from jax.experimental import pallas as pl
from jax.experimental.pallas import tpu as pltpu

_LANE = 128
_MIB = 1024 * 1024


def _vmem_capacity_bytes():
    """Physical VMEM per TensorCore; conservative fallback if not queryable."""
    try:
        info = pltpu.get_tpu_info()
        cap = getattr(info, "vmem_capacity_bytes", None)
        if cap:
            return int(cap)
    except Exception:
        pass
    return 64 * _MIB  # v7x per-core size: safe lower bound on every generation


def _finalize_loss(sim, ema):
    # torch.norm(S, 2, 1).reshape(-1, 1): per-row L2 norm, then divide.
    # (All-zero rows give NaN, matching the reference's divide-by-zero.)
    sim_n = sim / jnp.sqrt(jnp.sum(sim * sim, axis=1, keepdims=True))
    ema_n = ema / jnp.sqrt(jnp.sum(ema * ema, axis=1, keepdims=True))
    diff = sim_n - ema_n
    return jnp.sum(diff * diff)


# Contract the last axes of both operands: X @ X.T without an explicit .T.
# (Checked with pl.lower_as_mlir that for the small-B Grams here the implicit
# MXU operand transpose stays cheap and hidden under the DMA.)
_DN = (((1,), (1,)), ((), ()))


def _single_block_kernel(a_ref, e_ref, sim_ref, ema_ref):
    # Whole (B, D) operands resident in VMEM; one Gram per input, f32 acc.
    sim_ref[...] = lax.dot_general(a_ref[...], a_ref[...], _DN,
                                   preferred_element_type=jnp.float32)
    ema_ref[...] = lax.dot_general(e_ref[...], e_ref[...], _DN,
                                   preferred_element_type=jnp.float32)


def _tiled_kernel(a_ref, e_ref, sim_ref, ema_ref, *, d, tk, k_per_core,
                  need_mask):
    c = pl.program_id(0)   # which half of the D sweep (parallel / per-core)
    k = pl.program_id(1)   # K step within that half (arbitrary / reduction)

    @pl.when(k == 0)
    def _():
        sim_ref[...] = jnp.zeros_like(sim_ref)
        ema_ref[...] = jnp.zeros_like(ema_ref)

    a = a_ref[...]                                    # (B, tk)
    e = e_ref[...]
    if need_mask:
        # Zero the columns past D on straddling / overhanging tiles so they
        # don't contribute to the Gram (replaces the wrapper-side jnp.pad).
        col0 = (c * k_per_core + k) * tk
        cols = col0 + lax.broadcasted_iota(jnp.int32, a.shape, 1)
        valid = cols < d
        a = jnp.where(valid, a, 0)
        e = jnp.where(valid, e, 0)

    sim_ref[...] += lax.dot_general(a, a, _DN,
                                    preferred_element_type=jnp.float32)
    ema_ref[...] += lax.dot_general(e, e, _DN,
                                    preferred_element_type=jnp.float32)


def relation_mse_loss(activations, ema_activations, *,
                      tk=None, single_block_limit_bytes=None):
    assert activations.shape == ema_activations.shape
    batch = activations.shape[0]

    a = activations.reshape(batch, -1)
    e = ema_activations.reshape(batch, -1)

    # Feed native MXU dtypes (f32 / bf16) directly with an f32 accumulator;
    # only unsupported dtypes get upcast.
    if a.dtype not in (jnp.float32, jnp.bfloat16):
        a = a.astype(jnp.float32)
        e = e.astype(jnp.float32)

    d = a.shape[1]
    itemsize = jnp.dtype(a.dtype).itemsize

    # ---------------- generation-aware VMEM budget ----------------
    vmem_cap = _vmem_capacity_bytes()
    vmem_limit = min((vmem_cap * 3) // 4, 96 * _MIB)  # ~96 MiB v5e/v6e, ~48 MiB v7x
    max_block_bytes = 16 * _MIB if vmem_cap >= 128 * _MIB else 8 * _MIB
    if single_block_limit_bytes is None:
        single_block_limit_bytes = vmem_limit // 2

    # ---------------- single-block fast path (no grid, no pipeline) ----------------
    if 2 * batch * d * itemsize <= single_block_limit_bytes:
        sim, ema = pl.pallas_call(
            _single_block_kernel,
            out_shape=(jax.ShapeDtypeStruct((batch, batch), jnp.float32),
                       jax.ShapeDtypeStruct((batch, batch), jnp.float32)),
            compiler_params=pltpu.CompilerParams(vmem_limit_bytes=vmem_limit),
        )(a, e)
        return _finalize_loss(sim, ema)

    # ---------------- tiled D reduction, split across two cores ----------------
    # VMEM: 2 inputs x 2 pipeline buffers x (batch, tk) blocks + two (B, B)
    # f32 output/accumulator blocks (counted double-buffered) + headroom.
    out_bytes = 2 * 2 * batch * batch * 4
    usable = vmem_limit - out_bytes - 2 * _MIB
    min_block = batch * _LANE * itemsize
    if usable < 4 * min_block:
        # TODO(synk): row-tile the Gram (B axis) for very large batch instead
        # of bailing out.
        raise ValueError(
            f"batch={batch} too large for this kernel's VMEM budget "
            f"({vmem_limit} bytes); row-tiled fallback not implemented.")

    per_block_cap = min(max_block_bytes, usable // 4)
    tk_cap = max(_LANE, (per_block_cap // (batch * itemsize)) // _LANE * _LANE)
    if tk is None:
        tk = tk_cap                                    # biggest tile that fits
    else:
        tk = max(_LANE, (int(tk) // _LANE) * _LANE)
        tk = min(tk, tk_cap)
    tk = min(tk, pl.cdiv(d, _LANE) * _LANE)            # don't exceed the problem

    nk = pl.cdiv(d, tk)            # total K tiles
    k_per_core = pl.cdiv(nk, 2)    # K tiles per core (leading parallel axis)
    need_mask = (2 * k_per_core * tk) != d

    def x_map(c, k):
        # Clamp so the overhanging step of an odd split never DMAs a fully
        # out-of-bounds block; its contribution is zeroed by the in-kernel mask.
        return (0, jnp.minimum(c * k_per_core + k, nk - 1))

    out_map = lambda c, k: (c, 0, 0)

    sim_p, ema_p = pl.pallas_call(
        functools.partial(_tiled_kernel, d=d, tk=tk, k_per_core=k_per_core,
                          need_mask=need_mask),
        out_shape=(jax.ShapeDtypeStruct((2, batch, batch), jnp.float32),
                   jax.ShapeDtypeStruct((2, batch, batch), jnp.float32)),
        grid_spec=pltpu.PrefetchScalarGridSpec(
            num_scalar_prefetch=0,
            grid=(2, k_per_core),
            # NOTE: pipeline_mode=pl.Buffered(3) on these specs is a further
            # knob if DMA is still exposed after enlarging tk.
            in_specs=[pl.BlockSpec((batch, tk), x_map),
                      pl.BlockSpec((batch, tk), x_map)],
            out_specs=[pl.BlockSpec((None, batch, batch), out_map),
                       pl.BlockSpec((None, batch, batch), out_map)],
        ),
        compiler_params=pltpu.CompilerParams(
            dimension_semantics=("parallel", "arbitrary"),
            vmem_limit_bytes=vmem_limit,
        ),
    )(a, e)

    # Tiny (B, B) epilogue in plain JAX: sum per-core partial Grams,
    # row-normalize, MSE.
    return _finalize_loss(sim_p[0] + sim_p[1], ema_p[0] + ema_p[1])


def _reference(activations, ema_activations):
    b = activations.shape[0]
    a = activations.reshape(b, -1).astype(jnp.float32)
    e = ema_activations.reshape(b, -1).astype(jnp.float32)
    s = a @ a.T
    s = s / jnp.linalg.norm(s, axis=1, keepdims=True)
    se = e @ e.T
    se = se / jnp.linalg.norm(se, axis=1, keepdims=True)
    return jnp.sum((s - se) ** 2)


if __name__ == "__main__":
    key = jax.random.PRNGKey(0)
    k1, k2, k3, k4 = jax.random.split(key, 4)

    # NCHW inputs, as the PyTorch module would receive from a conv net.
    x = jax.random.normal(k1, (2, 4, 16, 16), dtype=jnp.float32)
    x_ema = x + 0.05 * jax.random.normal(k2, (2, 4, 16, 16), dtype=jnp.float32)
    ref = _reference(x, x_ema)

    # 1) Default path: whole problem fits in VMEM -> single-block kernel.
    loss = relation_mse_loss(x, x_ema)
    jax.block_until_ready(loss)
    assert jnp.allclose(loss, ref, rtol=1e-5, atol=1e-5), (loss, ref)

    # 2) Force the tiled / two-core path (multi-step D reduction).
    loss_t = relation_mse_loss(x, x_ema, tk=256, single_block_limit_bytes=0)
    jax.block_until_ready(loss_t)
    assert jnp.allclose(loss_t, ref, rtol=1e-5, atol=1e-5), (loss_t, ref)

    # 3) Tiled path with a non-lane-aligned D and an odd tile count
    #    (exercises the in-kernel tail mask and the overhang clamp).
    y = jax.random.normal(k3, (2, 3, 10, 11), dtype=jnp.float32)      # D = 330
    y_ema = y + 0.05 * jax.random.normal(k4, (2, 3, 10, 11), dtype=jnp.float32)
    loss_y = relation_mse_loss(y, y_ema, tk=128, single_block_limit_bytes=0)
    jax.block_until_ready(loss_y)
    ref_y = _reference(y, y_ema)
    assert jnp.allclose(loss_y, ref_y, rtol=1e-5, atol=1e-5), (loss_y, ref_y)

    print("KERNEL_OK")
</pallas_src>

<mosaic_0001>
module attributes {stable_mosaic.version = 11 : i64} {
  func.func @_single_block_kernel(%arg0: memref<2x1024xf32, #tpu.memory_space<vmem>>, %arg1: memref<2x1024xf32, #tpu.memory_space<vmem>>, %arg2: memref<2x2xf32, #tpu.memory_space<vmem>>, %arg3: memref<2x2xf32, #tpu.memory_space<vmem>>) attributes {dimension_semantics = [], scalar_prefetch = 0 : i64, scratch_operands = 0 : i64, tpu.core_type = #tpu.core_type<tc>} {
    %c0 = arith.constant 0 : index
    %c0_0 = arith.constant 0 : index
    %0 = vector.load %arg0[%c0, %c0_0] : memref<2x1024xf32, #tpu.memory_space<vmem>>, vector<2x1024xf32>
    %c0_1 = arith.constant 0 : index
    %c0_2 = arith.constant 0 : index
    %1 = vector.load %arg0[%c0_1, %c0_2] : memref<2x1024xf32, #tpu.memory_space<vmem>>, vector<2x1024xf32>
    %cst = arith.constant dense<0.000000e+00> : vector<2x2xf32>
    %2 = tpu.matmul %0, %1, %cst {dimension_numbers = #tpu.dot_dimension_numbers<[1], [1], [0], [0], [0, 0, 1, 0], [], []>} : vector<2x1024xf32>, vector<2x1024xf32>, vector<2x2xf32> -> vector<2x2xf32>
    %c0_3 = arith.constant 0 : index
    %c0_4 = arith.constant 0 : index
    %3 = vector.load %arg2[%c0_3, %c0_4] : memref<2x2xf32, #tpu.memory_space<vmem>>, vector<2x2xf32>
    tpu.vector_store %arg2[%c0_3, %c0_4], %2 {strides = array<i32>} : memref<2x2xf32, #tpu.memory_space<vmem>>, vector<2x2xf32>,
    %c0_5 = arith.constant 0 : index
    %c0_6 = arith.constant 0 : index
    %4 = vector.load %arg1[%c0_5, %c0_6] : memref<2x1024xf32, #tpu.memory_space<vmem>>, vector<2x1024xf32>
    %c0_7 = arith.constant 0 : index
    %c0_8 = arith.constant 0 : index
    %5 = vector.load %arg1[%c0_7, %c0_8] : memref<2x1024xf32, #tpu.memory_space<vmem>>, vector<2x1024xf32>
    %cst_9 = arith.constant dense<0.000000e+00> : vector<2x2xf32>
    %6 = tpu.matmul %4, %5, %cst_9 {dimension_numbers = #tpu.dot_dimension_numbers<[1], [1], [0], [0], [0, 0, 1, 0], [], []>} : vector<2x1024xf32>, vector<2x1024xf32>, vector<2x2xf32> -> vector<2x2xf32>
    %c0_10 = arith.constant 0 : index
    %c0_11 = arith.constant 0 : index
    %7 = vector.load %arg3[%c0_10, %c0_11] : memref<2x2xf32, #tpu.memory_space<vmem>>, vector<2x2xf32>
    tpu.vector_store %arg3[%c0_10, %c0_11], %6 {strides = array<i32>} : memref<2x2xf32, #tpu.memory_space<vmem>>, vector<2x2xf32>,
    return
  }
}

</mosaic_0001>

<llo_original>
// kernel: tpu_custom_call.1
$region0: #{tpu_custom_call.1}
  #allocation0 [shape = 'u32[]', space=smem, size = 0x4, offset = 0x4, fixed_abs, tag = 'smem constant byte address 0x4 - core index']
  #allocation1 [shape = 'u32[72,128]{1,0:T(1,128)}', space=vmem, size = 0x9000, scoped, tag = 'internal scratch']
  %s0 = inlined_call_operand.hbm [shape: f32[2,1024], index: 0, kind: input, shape index: {}]
  %s1 = inlined_call_operand.hbm [shape: f32[2,1024], index: 1, kind: input, shape index: {}]
  %s2 = inlined_call_operand.hbm [shape: f32[2,2], index: 2, kind: output, shape index: {0}]
  %s3 = inlined_call_operand.hbm [shape: f32[2,2], index: 3, kind: output, shape index: {1}]
  %4 = xla_tuple %s2, %s3
  %s5 = sld [smem:[#allocation0]]
  $region34: #{tpu_custom_call.1} parent=0
    _
  %s7 = ssub.s32 1, %s5
  %s8 = scalar_select 0, %s7, %s5
  $region1: #{tpu_custom_call.1} parent=0
    #allocation2 [shape = 'u8[8192]{0}', space=vmem, size = 0x2000, scoped, tag = 'input window, operand 0, single buffered']
    #allocation3 [shape = 's32[1]{0}', space=sflag, size = 0x4, scoped, tag = 'scoped memory for tpu_custom_call.1']
    #allocation4 [shape = 's32[1]{0}', space=sflag, size = 0x4, scoped, tag = 'scoped memory for tpu_custom_call.1']
    #allocation5 [shape = 'u8[8192]{0}', space=vmem, size = 0x2000, scoped, tag = 'input window, operand 1, single buffered']
    #allocation6 [shape = 's32[1]{0}', space=sflag, size = 0x4, scoped, tag = 'scoped memory for tpu_custom_call.1']
    #allocation7 [shape = 'u8[1024]{0}', space=vmem, size = 0x400, scoped, tag = 'output window, operand 0, single buffered']
    #allocation8 [shape = 'u8[1024]{0}', space=vmem, size = 0x400, scoped, tag = 'output window, operand 1, single buffered']
    #allocation9 [shape = 's32[1]{0}', space=sflag, size = 0x4, scoped, tag = 'scoped memory for tpu_custom_call.1']
    %9 = vsyncpa [#allocation3], 0
    %10 = vsyncpa [#allocation6], 0
    %11 = vsyncpa [#allocation4], 0
    %12 = vsyncpa [#allocation9], 0
    // Predicated region
    $region2: #{tpu_custom_call.1} parent=1 // pred_check
      _
    $region3: #{tpu_custom_call.1} parent=1 // pred_check_branch
      %14 = sbr.rel (0) target = $region5
    $region4: #{tpu_custom_call.1} parent=1 // pred_region
      %16 = vsyncadd [#allocation3], 0
      %s18 = sshll.u32 %s0, 4
      %s19 = int_to_ptr.hbm [resolvable:$true] %s18
      %s20 = sshll.u32 [#allocation2], 4
      %s21 = int_to_ptr.vmem [resolvable:$true] %s20
      %23 = dma.hbm_to_vmem [thread:$0]  %s19, 256, %s21, [#allocation3]
    $region5: #{tpu_custom_call.1} parent=1 // pred_fallthru
      _
    // Predicated region
    $region6: #{tpu_custom_call.1} parent=1 // pred_check
      _
    $region7: #{tpu_custom_call.1} parent=1 // pred_check_branch
      %25 = sbr.rel (0) target = $region9
    $region8: #{tpu_custom_call.1} parent=1 // pred_region
      %27 = vsyncadd [#allocation6], 0
      %s29 = sshll.u32 %s1, 4
      %s30 = int_to_ptr.hbm [resolvable:$true] %s29
      %s31 = sshll.u32 [#allocation5], 4
      %s32 = int_to_ptr.vmem [resolvable:$true] %s31
      %34 = dma.hbm_to_vmem [thread:$0]  %s30, 256, %s32, [#allocation6]
    $region9: #{tpu_custom_call.1} parent=1 // pred_fallthru
      _
    // Predicated region
    $region10: #{tpu_custom_call.1} parent=1 // pred_check
      _
    $region11: #{tpu_custom_call.1} parent=1 // pred_check_branch
      %36 = sbr.rel (0) target = $region13
    $region12: #{tpu_custom_call.1} parent=1 // pred_region
      %38 = dma.done [#allocation3], 256
    $region13: #{tpu_custom_call.1} parent=1 // pred_fallthru
      _
    // Predicated region
    $region14: #{tpu_custom_call.1} parent=1 // pred_check
      _
    $region15: #{tpu_custom_call.1} parent=1 // pred_check_branch
      %40 = sbr.rel (0) target = $region17
    $region16: #{tpu_custom_call.1} parent=1 // pred_region
      %42 = dma.done [#allocation6], 256
    $region17: #{tpu_custom_call.1} parent=1 // pred_fallthru
      _
    %v43 = vld [vmem:[#allocation2] sm:$0xff]
    %v44 = vld [vmem:[#allocation2 + $0x8] sm:$0xff]
    %47 = vst [vmem:[#allocation1] ss:$4 sm:$0xff] %v43
    %s48 = scalar_lea.vmem [#allocation1], 32
    %49 = vst [vmem:[%s48] ss:$4 sm:$0xff] %v44
    %v50 = vld.sshfl [vmem:[#allocation1] sm:$0xff pattern:$0x73625140]
    %v51 = vld.sshfl [vmem:[#allocation1 + $0x8] sm:$0xff pattern:$0x73625140]
    %v52 = vld.sshfl [vmem:[#allocation1 + $0x10] sm:$0xff pattern:$0x73625140]
    %v53 = vld.sshfl [vmem:[#allocation1 + $0x18] sm:$0xff pattern:$0x73625140]
    %v54 = vld.sshfl [vmem:[#allocation1 + $0x20] sm:$0xff pattern:$0x73625140]
    %v55 = vld.sshfl [vmem:[#allocation1 + $0x28] sm:$0xff pattern:$0x73625140]
    %v56 = vld.sshfl [vmem:[#allocation1 + $0x30] sm:$0xff pattern:$0x73625140]
    %v57 = vld.sshfl [vmem:[#allocation1 + $0x38] sm:$0xff pattern:$0x73625140]
    %66 = vst [vmem:[#allocation1] ss:$4 sm:$0xff] %v43
    %s67 = scalar_lea.vmem [#allocation1], 32
    %68 = vst [vmem:[%s67] ss:$4 sm:$0xff] %v44
    %v69 = vld.sshfl [vmem:[#allocation1] sm:$0xff pattern:$0x73625140]
    %v70 = vld.sshfl [vmem:[#allocation1 + $0x8] sm:$0xff pattern:$0x73625140]
    %v71 = vld.sshfl [vmem:[#allocation1 + $0x10] sm:$0xff pattern:$0x73625140]
    %v72 = vld.sshfl [vmem:[#allocation1 + $0x18] sm:$0xff pattern:$0x73625140]
    %v73 = vld.sshfl [vmem:[#allocation1 + $0x20] sm:$0xff pattern:$0x73625140]
    %v74 = vld.sshfl [vmem:[#allocation1 + $0x28] sm:$0xff pattern:$0x73625140]
    %v75 = vld.sshfl [vmem:[#allocation1 + $0x30] sm:$0xff pattern:$0x73625140]
    %v76 = vld.sshfl [vmem:[#allocation1 + $0x38] sm:$0xff pattern:$0x73625140]
    %85 = vmatpush.xpose.msra.mxu0 0.0
    %86 = vmatpush.xpose.msra.mxu0 0.0
    %87 = vmatpush.xpose.msra.mxu0 0.0
    %88 = vmatpush.xpose.msra.mxu0 0.0
    %89 = vmatpush.xpose.msra.mxu0 0.0
    %90 = vmatpush.xpose.msra.mxu0 0.0
    %91 = vmatpush.xpose.msra.mxu0 0.0
    %92 = vmatpush.xpose.msra.mxu0 0.0
    %93 = vmatpush.xpose.msra.mxu0 0.0
    %94 = vmatpush.xpose.msra.mxu0 0.0
    %95 = vmatpush.xpose.msra.mxu0 0.0
    %96 = vmatpush.xpose.msra.mxu0 0.0
    %97 = vmatpush.xpose.msra.mxu0 0.0
    %98 = vmatpush.xpose.msra.mxu0 0.0
    %99 = vmatpush.xpose.msra.mxu0 0.0
    %100 = vmatpush.xpose.msra.mxu0 %v69
    %101 = vmatmul.f32.gmra.mxu0 %v50
    %v102 = vpop.f32.mrf.mxu0
    %v103 = vadd.f32 0.0, %v102
    %104 = vdwg.mxu0
    %105 = vmatpush.xpose.msra.mxu0 0.0
    %106 = vmatpush.xpose.msra.mxu0 0.0
    %107 = vmatpush.xpose.msra.mxu0 0.0
    %108 = vmatpush.xpose.msra.mxu0 0.0
    %109 = vmatpush.xpose.msra.mxu0 0.0
    %110 = vmatpush.xpose.msra.mxu0 0.0
    %111 = vmatpush.xpose.msra.mxu0 0.0
    %112 = vmatpush.xpose.msra.mxu0 0.0
    %113 = vmatpush.xpose.msra.mxu0 0.0
    %114 = vmatpush.xpose.msra.mxu0 0.0
    %115 = vmatpush.xpose.msra.mxu0 0.0
    %116 = vmatpush.xpose.msra.mxu0 0.0
    %117 = vmatpush.xpose.msra.mxu0 0.0
    %118 = vmatpush.xpose.msra.mxu0 0.0
    %119 = vmatpush.xpose.msra.mxu0 0.0
    %120 = vmatpush.xpose.msra.mxu0 %v70
    %121 = vmatmul.f32.gmra.mxu0 %v51
    %v122 = vpop.f32.mrf.mxu0
    %v123 = vadd.f32 %v103, %v122
    %124 = vdwg.mxu0
    %125 = vmatpush.xpose.msra.mxu0 0.0
    %126 = vmatpush.xpose.msra.mxu0 0.0
    %127 = vmatpush.xpose.msra.mxu0 0.0
    %128 = vmatpush.xpose.msra.mxu0 0.0
    %129 = vmatpush.xpose.msra.mxu0 0.0
    %130 = vmatpush.xpose.msra.mxu0 0.0
    %131 = vmatpush.xpose.msra.mxu0 0.0
    %132 = vmatpush.xpose.msra.mxu0 0.0
    %133 = vmatpush.xpose.msra.mxu0 0.0
    %134 = vmatpush.xpose.msra.mxu0 0.0
    %135 = vmatpush.xpose.msra.mxu0 0.0
    %136 = vmatpush.xpose.msra.mxu0 0.0
    %137 = vmatpush.xpose.msra.mxu0 0.0
    %138 = vmatpush.xpose.msra.mxu0 0.0
    %139 = vmatpush.xpose.msra.mxu0 0.0
    %140 = vmatpush.xpose.msra.mxu0 %v71
    %141 = vmatmul.f32.gmra.mxu0 %v52
    %v142 = vpop.f32.mrf.mxu0
    %v143 = vadd.f32 %v123, %v142
    %144 = vdwg.mxu0
    %145 = vmatpush.xpose.msra.mxu0 0.0
    %146 = vmatpush.xpose.msra.mxu0 0.0
    %147 = vmatpush.xpose.msra.mxu0 0.0
    %148 = vmatpush.xpose.msra.mxu0 0.0
    %149 = vmatpush.xpose.msra.mxu0 0.0
    %150 = vmatpush.xpose.msra.mxu0 0.0
    %151 = vmatpush.xpose.msra.mxu0 0.0
    %152 = vmatpush.xpose.msra.mxu0 0.0
    %153 = vmatpush.xpose.msra.mxu0 0.0
    %154 = vmatpush.xpose.msra.mxu0 0.0
    %155 = vmatpush.xpose.msra.mxu0 0.0
    %156 = vmatpush.xpose.msra.mxu0 0.0
    %157 = vmatpush.xpose.msra.mxu0 0.0
    %158 = vmatpush.xpose.msra.mxu0 0.0
    %159 = vmatpush.xpose.msra.mxu0 0.0
    %160 = vmatpush.xpose.msra.mxu0 %v72
    %161 = vmatmul.f32.gmra.mxu0 %v53
    %v162 = vpop.f32.mrf.mxu0
    %v163 = vadd.f32 %v143, %v162
    %164 = vdwg.mxu0
    %165 = vmatpush.xpose.msra.mxu0 0.0
    %166 = vmatpush.xpose.msra.mxu0 0.0
    %167 = vmatpush.xpose.msra.mxu0 0.0
    %168 = vmatpush.xpose.msra.mxu0 0.0
    %169 = vmatpush.xpose.msra.mxu0 0.0
    %170 = vmatpush.xpose.msra.mxu0 0.0
    %171 = vmatpush.xpose.msra.mxu0 0.0
    %172 = vmatpush.xpose.msra.mxu0 0.0
    %173 = vmatpush.xpose.msra.mxu0 0.0
    %174 = vmatpush.xpose.msra.mxu0 0.0
    %175 = vmatpush.xpose.msra.mxu0 0.0
    %176 = vmatpush.xpose.msra.mxu0 0.0
    %177 = vmatpush.xpose.msra.mxu0 0.0
    %178 = vmatpush.xpose.msra.mxu0 0.0
    %179 = vmatpush.xpose.msra.mxu0 0.0
    %180 = vmatpush.xpose.msra.mxu0 %v73
    %181 = vmatmul.f32.gmra.mxu0 %v54
    %v182 = vpop.f32.mrf.mxu0
    %v183 = vadd.f32 %v163, %v182
    %184 = vdwg.mxu0
    %185 = vmatpush.xpose.msra.mxu0 0.0
    %186 = vmatpush.xpose.msra.mxu0 0.0
    %187 = vmatpush.xpose.msra.mxu0 0.0
    %188 = vmatpush.xpose.msra.mxu0 0.0
    %189 = vmatpush.xpose.msra.mxu0 0.0
    %190 = vmatpush.xpose.msra.mxu0 0.0
    %191 = vmatpush.xpose.msra.mxu0 0.0
    %192 = vmatpush.xpose.msra.mxu0 0.0
    %193 = vmatpush.xpose.msra.mxu0 0.0
    %194 = vmatpush.xpose.msra.mxu0 0.0
    %195 = vmatpush.xpose.msra.mxu0 0.0
    %196 = vmatpush.xpose.msra.mxu0 0.0
    %197 = vmatpush.xpose.msra.mxu0 0.0
    %198 = vmatpush.xpose.msra.mxu0 0.0
    %199 = vmatpush.xpose.msra.mxu0 0.0
    %200 = vmatpush.xpose.msra.mxu0 %v74
    %201 = vmatmul.f32.gmra.mxu0 %v55
    %v202 = vpop.f32.mrf.mxu0
    %v203 = vadd.f32 %v183, %v202
    %204 = vdwg.mxu0
    %205 = vmatpush.xpose.msra.mxu0 0.0
    %206 = vmatpush.xpose.msra.mxu0 0.0
    %207 = vmatpush.xpose.msra.mxu0 0.0
    %208 = vmatpush.xpose.msra.mxu0 0.0
    %209 = vmatpush.xpose.msra.mxu0 0.0
    %210 = vmatpush.xpose.msra.mxu0 0.0
    %211 = vmatpush.xpose.msra.mxu0 0.0
    %212 = vmatpush.xpose.msra.mxu0 0.0
    %213 = vmatpush.xpose.msra.mxu0 0.0
    %214 = vmatpush.xpose.msra.mxu0 0.0
    %215 = vmatpush.xpose.msra.mxu0 0.0
    %216 = vmatpush.xpose.msra.mxu0 0.0
    %217 = vmatpush.xpose.msra.mxu0 0.0
    %218 = vmatpush.xpose.msra.mxu0 0.0
    %219 = vmatpush.xpose.msra.mxu0 0.0
    %220 = vmatpush.xpose.msra.mxu0 %v75
    %221 = vmatmul.f32.gmra.mxu0 %v56
    %v222 = vpop.f32.mrf.mxu0
    %v223 = vadd.f32 %v203, %v222
    %224 = vdwg.mxu0
    %225 = vmatpush.xpose.msra.mxu0 0.0
    %226 = vmatpush.xpose.msra.mxu0 0.0
    %227 = vmatpush.xpose.msra.mxu0 0.0
    %228 = vmatpush.xpose.msra.mxu0 0.0
    %229 = vmatpush.xpose.msra.mxu0 0.0
    %230 = vmatpush.xpose.msra.mxu0 0.0
    %231 = vmatpush.xpose.msra.mxu0 0.0
    %232 = vmatpush.xpose.msra.mxu0 0.0
    %233 = vmatpush.xpose.msra.mxu0 0.0
    %234 = vmatpush.xpose.msra.mxu0 0.0
    %235 = vmatpush.xpose.msra.mxu0 0.0
    %236 = vmatpush.xpose.msra.mxu0 0.0
    %237 = vmatpush.xpose.msra.mxu0 0.0
    %238 = vmatpush.xpose.msra.mxu0 0.0
    %239 = vmatpush.xpose.msra.mxu0 0.0
    %240 = vmatpush.xpose.msra.mxu0 %v76
    %241 = vmatmul.f32.gmra.mxu0 %v57
    %v242 = vpop.f32.mrf.mxu0
    %v243 = vadd.f32 %v223, %v242
    %244 = vdwg.mxu0
    %vm245 = vcmask 9216
    %246 = vst.msk [vmem:[#allocation7] sm:$0x3] %vm245, %v243
    %v247 = vld [vmem:[#allocation5] sm:$0xff]
    %v248 = vld [vmem:[#allocation5 + $0x8] sm:$0xff]
    %251 = vst [vmem:[#allocation1] ss:$4 sm:$0xff] %v247
    %s252 = scalar_lea.vmem [#allocation1], 32
    %253 = vst [vmem:[%s252] ss:$4 sm:$0xff] %v248
    %v254 = vld.sshfl [vmem:[#allocation1] sm:$0xff pattern:$0x73625140]
    %v255 = vld.sshfl [vmem:[#allocation1 + $0x8] sm:$0xff pattern:$0x73625140]
    %v256 = vld.sshfl [vmem:[#allocation1 + $0x10] sm:$0xff pattern:$0x73625140]
    %v257 = vld.sshfl [vmem:[#allocation1 + $0x18] sm:$0xff pattern:$0x73625140]
    %v258 = vld.sshfl [vmem:[#allocation1 + $0x20] sm:$0xff pattern:$0x73625140]
    %v259 = vld.sshfl [vmem:[#allocation1 + $0x28] sm:$0xff pattern:$0x73625140]
    %v260 = vld.sshfl [vmem:[#allocation1 + $0x30] sm:$0xff pattern:$0x73625140]
    %v261 = vld.sshfl [vmem:[#allocation1 + $0x38] sm:$0xff pattern:$0x73625140]
    %270 = vst [vmem:[#allocation1] ss:$4 sm:$0xff] %v247
    %s271 = scalar_lea.vmem [#allocation1], 32
    %272 = vst [vmem:[%s271] ss:$4 sm:$0xff] %v248
    %v273 = vld.sshfl [vmem:[#allocation1] sm:$0xff pattern:$0x73625140]
    %v274 = vld.sshfl [vmem:[#allocation1 + $0x8] sm:$0xff pattern:$0x73625140]
    %v275 = vld.sshfl [vmem:[#allocation1 + $0x10] sm:$0xff pattern:$0x73625140]
    %v276 = vld.sshfl [vmem:[#allocation1 + $0x18] sm:$0xff pattern:$0x73625140]
    %v277 = vld.sshfl [vmem:[#allocation1 + $0x20] sm:$0xff pattern:$0x73625140]
    %v278 = vld.sshfl [vmem:[#allocation1 + $0x28] sm:$0xff pattern:$0x73625140]
    %v279 = vld.sshfl [vmem:[#allocation1 + $0x30] sm:$0xff pattern:$0x73625140]
    %v280 = vld.sshfl [vmem:[#allocation1 + $0x38] sm:$0xff pattern:$0x73625140]
    %289 = vmatpush.xpose.msra.mxu0 0.0
    %290 = vmatpush.xpose.msra.mxu0 0.0
    %291 = vmatpush.xpose.msra.mxu0 0.0
    %292 = vmatpush.xpose.msra.mxu0 0.0
    %293 = vmatpush.xpose.msra.mxu0 0.0
    %294 = vmatpush.xpose.msra.mxu0 0.0
    %295 = vmatpush.xpose.msra.mxu0 0.0
    %296 = vmatpush.xpose.msra.mxu0 0.0
    %297 = vmatpush.xpose.msra.mxu0 0.0
    %298 = vmatpush.xpose.msra.mxu0 0.0
    %299 = vmatpush.xpose.msra.mxu0 0.0
    %300 = vmatpush.xpose.msra.mxu0 0.0
    %301 = vmatpush.xpose.msra.mxu0 0.0
    %302 = vmatpush.xpose.msra.mxu0 0.0
    %303 = vmatpush.xpose.msra.mxu0 0.0
    %304 = vmatpush.xpose.msra.mxu0 %v273
    %305 = vmatmul.f32.gmra.mxu0 %v254
    %v306 = vpop.f32.mrf.mxu0
    %v307 = vadd.f32 0.0, %v306
    %308 = vdwg.mxu0
    %309 = vmatpush.xpose.msra.mxu0 0.0
    %310 = vmatpush.xpose.msra.mxu0 0.0
    %311 = vmatpush.xpose.msra.mxu0 0.0
    %312 = vmatpush.xpose.msra.mxu0 0.0
    %313 = vmatpush.xpose.msra.mxu0 0.0
    %314 = vmatpush.xpose.msra.mxu0 0.0
    %315 = vmatpush.xpose.msra.mxu0 0.0
    %316 = vmatpush.xpose.msra.mxu0 0.0
    %317 = vmatpush.xpose.msra.mxu0 0.0
    %318 = vmatpush.xpose.msra.mxu0 0.0
    %319 = vmatpush.xpose.msra.mxu0 0.0
    %320 = vmatpush.xpose.msra.mxu0 0.0
    %321 = vmatpush.xpose.msra.mxu0 0.0
    %322 = vmatpush.xpose.msra.mxu0 0.0
    %323 = vmatpush.xpose.msra.mxu0 0.0
    %324 = vmatpush.xpose.msra.mxu0 %v274
    %325 = vmatmul.f32.gmra.mxu0 %v255
    %v326 = vpop.f32.mrf.mxu0
    %v327 = vadd.f32 %v307, %v326
    %328 = vdwg.mxu0
    %329 = vmatpush.xpose.msra.mxu0 0.0
    %330 = vmatpush.xpose.msra.mxu0 0.0
    %331 = vmatpush.xpose.msra.mxu0 0.0
    %332 = vmatpush.xpose.msra.mxu0 0.0
    %333 = vmatpush.xpose.msra.mxu0 0.0
    %334 = vmatpush.xpose.msra.mxu0 0.0
    %335 = vmatpush.xpose.msra.mxu0 0.0
    %336 = vmatpush.xpose.msra.mxu0 0.0
    %337 = vmatpush.xpose.msra.mxu0 0.0
    %338 = vmatpush.xpose.msra.mxu0 0.0
    %339 = vmatpush.xpose.msra.mxu0 0.0
    %340 = vmatpush.xpose.msra.mxu0 0.0
    %341 = vmatpush.xpose.msra.mxu0 0.0
    %342 = vmatpush.xpose.msra.mxu0 0.0
    %343 = vmatpush.xpose.msra.mxu0 0.0
    %344 = vmatpush.xpose.msra.mxu0 %v275
    %345 = vmatmul.f32.gmra.mxu0 %v256
    %v346 = vpop.f32.mrf.mxu0
    %v347 = vadd.f32 %v327, %v346
    %348 = vdwg.mxu0
    %349 = vmatpush.xpose.msra.mxu0 0.0
    %350 = vmatpush.xpose.msra.mxu0 0.0
    %351 = vmatpush.xpose.msra.mxu0 0.0
    %352 = vmatpush.xpose.msra.mxu0 0.0
    %353 = vmatpush.xpose.msra.mxu0 0.0
    %354 = vmatpush.xpose.msra.mxu0 0.0
    %355 = vmatpush.xpose.msra.mxu0 0.0
    %356 = vmatpush.xpose.msra.mxu0 0.0
    %357 = vmatpush.xpose.msra.mxu0 0.0
    %358 = vmatpush.xpose.msra.mxu0 0.0
    %359 = vmatpush.xpose.msra.mxu0 0.0
    %360 = vmatpush.xpose.msra.mxu0 0.0
    %361 = vmatpush.xpose.msra.mxu0 0.0
    %362 = vmatpush.xpose.msra.mxu0 0.0
    %363 = vmatpush.xpose.msra.mxu0 0.0
    %364 = vmatpush.xpose.msra.mxu0 %v276
    %365 = vmatmul.f32.gmra.mxu0 %v257
    %v366 = vpop.f32.mrf.mxu0
    %v367 = vadd.f32 %v347, %v366
    %368 = vdwg.mxu0
    %369 = vmatpush.xpose.msra.mxu0 0.0
    %370 = vmatpush.xpose.msra.mxu0 0.0
    %371 = vmatpush.xpose.msra.mxu0 0.0
    %372 = vmatpush.xpose.msra.mxu0 0.0
    %373 = vmatpush.xpose.msra.mxu0 0.0
    %374 = vmatpush.xpose.msra.mxu0 0.0
    %375 = vmatpush.xpose.msra.mxu0 0.0
    %376 = vmatpush.xpose.msra.mxu0 0.0
    %377 = vmatpush.xpose.msra.mxu0 0.0
    %378 = vmatpush.xpose.msra.mxu0 0.0
    %379 = vmatpush.xpose.msra.mxu0 0.0
    %380 = vmatpush.xpose.msra.mxu0 0.0
    %381 = vmatpush.xpose.msra.mxu0 0.0
    %382 = vmatpush.xpose.msra.mxu0 0.0
    %383 = vmatpush.xpose.msra.mxu0 0.0
    %384 = vmatpush.xpose.msra.mxu0 %v277
    %385 = vmatmul.f32.gmra.mxu0 %v258
    %v386 = vpop.f32.mrf.mxu0
    %v387 = vadd.f32 %v367, %v386
    %388 = vdwg.mxu0
    %389 = vmatpush.xpose.msra.mxu0 0.0
    %390 = vmatpush.xpose.msra.mxu0 0.0
    %391 = vmatpush.xpose.msra.mxu0 0.0
    %392 = vmatpush.xpose.msra.mxu0 0.0
    %393 = vmatpush.xpose.msra.mxu0 0.0
    %394 = vmatpush.xpose.msra.mxu0 0.0
    %395 = vmatpush.xpose.msra.mxu0 0.0
    %396 = vmatpush.xpose.msra.mxu0 0.0
    %397 = vmatpush.xpose.msra.mxu0 0.0
    %398 = vmatpush.xpose.msra.mxu0 0.0
    %399 = vmatpush.xpose.msra.mxu0 0.0
    %400 = vmatpush.xpose.msra.mxu0 0.0
    %401 = vmatpush.xpose.msra.mxu0 0.0
    %402 = vmatpush.xpose.msra.mxu0 0.0
    %403 = vmatpush.xpose.msra.mxu0 0.0
    %404 = vmatpush.xpose.msra.mxu0 %v278
    %405 = vmatmul.f32.gmra.mxu0 %v259
    %v406 = vpop.f32.mrf.mxu0
    %v407 = vadd.f32 %v387, %v406
    %408 = vdwg.mxu0
    %409 = vmatpush.xpose.msra.mxu0 0.0
    %410 = vmatpush.xpose.msra.mxu0 0.0
    %411 = vmatpush.xpose.msra.mxu0 0.0
    %412 = vmatpush.xpose.msra.mxu0 0.0
    %413 = vmatpush.xpose.msra.mxu0 0.0
    %414 = vmatpush.xpose.msra.mxu0 0.0
    %415 = vmatpush.xpose.msra.mxu0 0.0
    %416 = vmatpush.xpose.msra.mxu0 0.0
    %417 = vmatpush.xpose.msra.mxu0 0.0
    %418 = vmatpush.xpose.msra.mxu0 0.0
    %419 = vmatpush.xpose.msra.mxu0 0.0
    %420 = vmatpush.xpose.msra.mxu0 0.0
    %421 = vmatpush.xpose.msra.mxu0 0.0
    %422 = vmatpush.xpose.msra.mxu0 0.0
    %423 = vmatpush.xpose.msra.mxu0 0.0
    %424 = vmatpush.xpose.msra.mxu0 %v279
    %425 = vmatmul.f32.gmra.mxu0 %v260
    %v426 = vpop.f32.mrf.mxu0
    %v427 = vadd.f32 %v407, %v426
    %428 = vdwg.mxu0
    %429 = vmatpush.xpose.msra.mxu0 0.0
    %430 = vmatpush.xpose.msra.mxu0 0.0
    %431 = vmatpush.xpose.msra.mxu0 0.0
    %432 = vmatpush.xpose.msra.mxu0 0.0
    %433 = vmatpush.xpose.msra.mxu0 0.0
    %434 = vmatpush.xpose.msra.mxu0 0.0
    %435 = vmatpush.xpose.msra.mxu0 0.0
    %436 = vmatpush.xpose.msra.mxu0 0.0
    %437 = vmatpush.xpose.msra.mxu0 0.0
    %438 = vmatpush.xpose.msra.mxu0 0.0
    %439 = vmatpush.xpose.msra.mxu0 0.0
    %440 = vmatpush.xpose.msra.mxu0 0.0
    %441 = vmatpush.xpose.msra.mxu0 0.0
    %442 = vmatpush.xpose.msra.mxu0 0.0
    %443 = vmatpush.xpose.msra.mxu0 0.0
    %444 = vmatpush.xpose.msra.mxu0 %v280
    %445 = vmatmul.f32.gmra.mxu0 %v261
    %v446 = vpop.f32.mrf.mxu0
    %v447 = vadd.f32 %v427, %v446
    %448 = vdwg.mxu0
    %449 = vst.msk [vmem:[#allocation8] sm:$0x3] %vm245, %v447
    // Predicated region
    $region18: #{tpu_custom_call.1} parent=1 // pred_check
      _
    $region19: #{tpu_custom_call.1} parent=1 // pred_check_branch
      %451 = sbr.rel (0) target = $region21
    $region20: #{tpu_custom_call.1} parent=1 // pred_region
      %453 = vsyncadd [#allocation4], 0
      %s455 = sshll.u32 [#allocation7], 4
      %s456 = int_to_ptr.vmem [resolvable:$true] %s455
      %s457 = sshll.u32 %s2, 4
      %s458 = int_to_ptr.hbm [resolvable:$true] %s457
      %460 = dma.vmem_to_hbm [thread:$0]  %s456, 32, %s458, [#allocation4]
    $region21: #{tpu_custom_call.1} parent=1 // pred_fallthru
      _
    // Predicated region
    $region22: #{tpu_custom_call.1} parent=1 // pred_check
      _
    $region23: #{tpu_custom_call.1} parent=1 // pred_check_branch
      %462 = sbr.rel (0) target = $region25
    $region24: #{tpu_custom_call.1} parent=1 // pred_region
      %464 = vsyncadd [#allocation9], 0
      %s466 = sshll.u32 [#allocation8], 4
      %s467 = int_to_ptr.vmem [resolvable:$true] %s466
      %s468 = sshll.u32 %s3, 4
      %s469 = int_to_ptr.hbm [resolvable:$true] %s468
      %471 = dma.vmem_to_hbm [thread:$0]  %s467, 32, %s469, [#allocation9]
    $region25: #{tpu_custom_call.1} parent=1 // pred_fallthru
      _
    // Predicated region
    $region26: #{tpu_custom_call.1} parent=1 // pred_check
      _
    $region27: #{tpu_custom_call.1} parent=1 // pred_check_branch
      %473 = sbr.rel (0) target = $region29
    $region28: #{tpu_custom_call.1} parent=1 // pred_region
      %475 = dma.done [#allocation4], 32
    $region29: #{tpu_custom_call.1} parent=1 // pred_fallthru
      _
    // Predicated region
    $region30: #{tpu_custom_call.1} parent=1 // pred_check
      _
    $region31: #{tpu_custom_call.1} parent=1 // pred_check_branch
      %477 = sbr.rel (0) target = $region33
    $region32: #{tpu_custom_call.1} parent=1 // pred_region
      %479 = dma.done [#allocation9], 32
    $region33: #{tpu_custom_call.1} parent=1 // pred_fallthru
      _
    %480 = vsyncpa [#allocation3], 1
    %481 = vsyncpa [#allocation6], 1
    %482 = vsyncpa [#allocation4], 1
    %483 = vsyncpa [#allocation9], 1

</llo_original>
